<compile_context>
chip_gen: v7x
topology: tpu7x:2x2x1
jax: 0.10.0
libtpu: 0.0.40
codegen_flags: <defaults>
</compile_context>

<pallas_src>
import functools

import jax
import jax.numpy as jnp
from jax.experimental import pallas as pl
from jax.experimental.pallas import tpu as pltpu

_LANES = 128
_MAX_BLOCK_ROWS = 2048     # (2048, 128) f32 block = 1 MiB per input per buffer
_ROW_ALIGN = 32            # safe sublane-tiling multiple for f32 / bf16 / 8-bit


def _loss_sums_kernel(p_ref, t_ref, *out_refs, alpha, gamma, use_focal,
                      block_rows, n_inner, valid_rows):
    """Accumulates lane-wise partial sums of the per-element BCE (and, when
    use_focal, the focal weight) into the resident (1, 128) output block(s)."""
    if use_focal:
        out_bce_ref, out_w_ref = out_refs
    else:
        (out_bce_ref,) = out_refs
        out_w_ref = None

    outer = pl.program_id(0)
    inner = pl.program_id(1)

    @pl.when(inner == 0)
    def _init():
        out_bce_ref[...] = jnp.zeros_like(out_bce_ref)
        if use_focal:
            out_w_ref[...] = jnp.zeros_like(out_w_ref)

    # Row-validity mask.  Handles (a) the ragged last block (rows past the array
    # end hold stale VMEM data) and (b) the duplicated trailing block that the
    # 2-way outer split may produce: its *unclamped* linear block index starts at
    # or past `valid_rows`, so every row is masked even though the clamped
    # index_map re-reads valid data.
    linear_block = outer * n_inner + inner
    row0 = linear_block * block_rows
    row_ids = row0 + jax.lax.broadcasted_iota(jnp.int32, (block_rows, 1), 0)
    valid = row_ids < valid_rows

    # Masked rows become (p=0, t=0), which contributes exactly 0 to both sums —
    # the same property the zero lane-padding in the wrapper relies on.
    p = jnp.where(valid, p_ref[...].astype(jnp.float32), 0.0)
    t = jnp.where(valid, t_ref[...].astype(jnp.float32), 0.0)

    q = 1.0 - p
    # PyTorch's BCELoss clamps each log term at -100.
    log_p = jnp.maximum(jnp.log(p), -100.0)
    log_q = jnp.maximum(jnp.log(q), -100.0)
    # -(t*log_p + (1-t)*log_q) == -(log_q + t*(log_p - log_q))   (fewer VPU ops)
    bce = -(log_q + t * (log_p - log_q))
    out_bce_ref[...] += jnp.sum(bce, axis=0, keepdims=True)

    if use_focal:
        # Integer gammas as multiplies -> EUP slot stays free for the two logs.
        if gamma == 2.0:
            pow_q = q * q
            pow_p = p * p
        elif gamma == 1.0:
            pow_q = q
            pow_p = p
        else:
            pow_q = q ** gamma
            pow_p = p ** gamma
        # t*alpha*pow_q + (1-t)*pow_p == t*(alpha*pow_q - pow_p) + pow_p
        w = t * (alpha * pow_q - pow_p) + pow_p
        out_w_ref[...] += jnp.sum(w, axis=0, keepdims=True)


def criterion_loss(output, label, use_focal=False, alpha=0.25, gamma=2.0,
                   weight=None, max_block_rows=_MAX_BLOCK_ROWS):
    """JAX/Pallas equivalent of criterionLoss.forward."""
    if weight is not None:
        # TODO(synk): per-element `weight` rescaling (nn.BCELoss(weight=...)) not implemented.
        raise NotImplementedError("per-element `weight` rescaling is not supported")

    alpha = float(alpha)
    gamma = float(gamma)

    preds = jnp.squeeze(output)                 # output.squeeze()
    targets = label
    if not jnp.issubdtype(targets.dtype, jnp.floating):
        targets = targets.astype(jnp.float32)   # label.float()

    n = preds.size
    p_flat = preds.reshape(-1)
    t_flat = targets.reshape(-1)

    # ---- tiling geometry ----
    rows = pl.cdiv(n, _LANES)
    pad = rows * _LANES - n
    if pad:
        # Only hit when n % 128 != 0.  Zero padding is exact: with p=0, t=0 both
        # the per-element BCE and the focal weight are exactly 0 (gamma > 0;
        # the module always uses gamma=2.0).
        p_flat = jnp.pad(p_flat, (0, pad))
        t_flat = jnp.pad(t_flat, (0, pad))
    p2d = p_flat.reshape(rows, _LANES)
    t2d = t_flat.reshape(rows, _LANES)

    if rows <= max_block_rows:
        block_rows = rows                              # full-dim block: always legal
    else:
        block_rows = max(_ROW_ALIGN,
                         (max_block_rows // _ROW_ALIGN) * _ROW_ALIGN)

    total_blocks = pl.cdiv(rows, block_rows)
    n_parallel = 2 if total_blocks >= 2 else 1         # v7x megacore split
    n_inner = pl.cdiv(total_blocks, n_parallel)
    last_block = total_blocks - 1

    def in_map(o, i):
        # Clamp the (possibly duplicated) trailing block; the in-kernel row mask
        # (computed from the unclamped index) zeroes its contribution.
        return (jnp.minimum(o * n_inner + i, last_block), 0)

    def out_map(o, i):
        return (o, 0)

    partial_shape = jax.ShapeDtypeStruct((n_parallel, _LANES), jnp.float32)
    if use_focal:
        out_shape = (partial_shape, partial_shape)
        out_specs = (pl.BlockSpec((1, _LANES), out_map),
                     pl.BlockSpec((1, _LANES), out_map))
    else:
        out_shape = partial_shape
        out_specs = pl.BlockSpec((1, _LANES), out_map)

    kernel = functools.partial(
        _loss_sums_kernel, alpha=alpha, gamma=gamma, use_focal=use_focal,
        block_rows=block_rows, n_inner=n_inner, valid_rows=rows)

    result = pl.pallas_call(
        kernel,
        out_shape=out_shape,
        grid=(n_parallel, n_inner),
        in_specs=[pl.BlockSpec((block_rows, _LANES), in_map),
                  pl.BlockSpec((block_rows, _LANES), in_map)],
        out_specs=out_specs,
        compiler_params=pltpu.CompilerParams(
            dimension_semantics=("parallel", "arbitrary"),
            vmem_limit_bytes=32 * 1024 * 1024),
    )(p2d, t2d)

    count = float(n)
    if use_focal:
        out_bce, out_w = result
        bce_mean = jnp.sum(out_bce) / count
        # focal = mean(t*a*(1-p)^g*bce_mean + (1-t)*p^g*bce_mean)
        #       = bce_mean * mean(t*a*(1-p)^g + (1-t)*p^g)   (scalar factors out)
        return bce_mean * (jnp.sum(out_w) / count)
    return jnp.sum(result) / count


# -------------------- pure-JAX reference (for verification) --------------------
def _criterion_loss_ref(output, label, use_focal=False, alpha=0.25, gamma=2.0):
    preds = jnp.squeeze(output).astype(jnp.float32)
    targets = label.astype(jnp.float32)
    log_p = jnp.maximum(jnp.log(preds), -100.0)
    log_1mp = jnp.maximum(jnp.log(1.0 - preds), -100.0)
    bce = jnp.mean(-(targets * log_p + (1.0 - targets) * log_1mp))
    if not use_focal:
        return bce
    loss = (targets * alpha * (1.0 - preds) ** gamma * bce
            + (1.0 - targets) * preds ** gamma * bce)
    return jnp.mean(loss)


if __name__ == "__main__":
    key = jax.random.PRNGKey(0)
    k1, k2, k3, k4 = jax.random.split(key, 4)

    # Small NCHW-like example: output (B, 1, H, W) probs in (0,1), label (B, H, W).
    output = jax.nn.sigmoid(jax.random.normal(k1, (2, 1, 16, 16), dtype=jnp.float32))
    label = (jax.random.uniform(k2, (2, 16, 16)) > 0.5).astype(jnp.float32)

    loss_bce = criterion_loss(output, label, use_focal=False)
    jax.block_until_ready(loss_bce)
    loss_focal = criterion_loss(output, label, use_focal=True)
    jax.block_until_ready(loss_focal)

    ref_bce = _criterion_loss_ref(output, label, use_focal=False)
    ref_focal = _criterion_loss_ref(output, label, use_focal=True)
    assert jnp.allclose(loss_bce, ref_bce, rtol=1e-4, atol=1e-6), (loss_bce, ref_bce)
    assert jnp.allclose(loss_focal, ref_focal, rtol=1e-4, atol=1e-6), (loss_focal, ref_focal)

    # Non-128-divisible element count -> exercises the zero-pad path.
    out2 = jax.nn.sigmoid(jax.random.normal(k3, (2, 1, 17, 13), dtype=jnp.float32))
    lab2 = (jax.random.uniform(k4, (2, 17, 13)) > 0.5).astype(jnp.float32)
    l2 = criterion_loss(out2, lab2, use_focal=True)
    jax.block_until_ready(l2)
    r2 = _criterion_loss_ref(out2, lab2, use_focal=True)
    assert jnp.allclose(l2, r2, rtol=1e-4, atol=1e-6), (l2, r2)

    # Multi-block + megacore split + ragged last block + duplicated trailing block:
    # force a small block size so small test data covers those paths.
    k5, k6 = jax.random.split(k3)
    out3 = jax.nn.sigmoid(jax.random.normal(k5, (4, 1, 120, 172), dtype=jnp.float32))
    lab3 = (jax.random.uniform(k6, (4, 120, 172)) > 0.5).astype(jnp.float32)
    l3_bce = criterion_loss(out3, lab3, use_focal=False, max_block_rows=64)
    l3_foc = criterion_loss(out3, lab3, use_focal=True, max_block_rows=64)
    jax.block_until_ready((l3_bce, l3_foc))
    assert jnp.allclose(l3_bce, _criterion_loss_ref(out3, lab3, use_focal=False),
                        rtol=1e-4, atol=1e-6), l3_bce
    assert jnp.allclose(l3_foc, _criterion_loss_ref(out3, lab3, use_focal=True),
                        rtol=1e-4, atol=1e-6), l3_foc

    print("KERNEL_OK")
</pallas_src>

<mosaic_0001>
module attributes {stable_mosaic.version = 11 : i64} {
  func.func @_loss_sums_kernel(%arg0: i32, %arg1: i32, %arg2: memref<4x128xf32, #tpu.memory_space<vmem>>, %arg3: memref<4x128xf32, #tpu.memory_space<vmem>>, %arg4: memref<1x128xf32, #tpu.memory_space<vmem>>) attributes {dimension_semantics = [#tpu.dimension_semantics<parallel>, #tpu.dimension_semantics<arbitrary>], iteration_bounds = array<i64: 1, 1>, scalar_prefetch = 0 : i64, scratch_operands = 0 : i64, tpu.core_type = #tpu.core_type<tc>, window_params = [{transform_indices = @transform_0, window_bounds = array<i64: 4, 128>}, {transform_indices = @transform_1, window_bounds = array<i64: 4, 128>}, {transform_indices = @transform_2, window_bounds = array<i64: 1, 128>}]} {
    %c0_i32 = arith.constant 0 : i32
    %0 = arith.cmpi eq, %arg1, %c0_i32 : i32
    %1 = arith.extui %0 : i1 to i32
    %c0_i32_0 = arith.constant 0 : i32
    %2 = arith.cmpi ne, %1, %c0_i32_0 : i32
    scf.if %2 {
      %cst_15 = arith.constant 0.000000e+00 : f32
      %39 = vector.broadcast %cst_15 : f32 to vector<1x128xf32>
      %c0_16 = arith.constant 0 : index
      %c0_17 = arith.constant 0 : index
      %40 = vector.load %arg4[%c0_16, %c0_17] : memref<1x128xf32, #tpu.memory_space<vmem>>, vector<1x128xf32>
      tpu.vector_store %arg4[%c0_16, %c0_17], %39 {strides = array<i32>} : memref<1x128xf32, #tpu.memory_space<vmem>>, vector<1x128xf32>,
    } else {
    }
    %c1_i32 = arith.constant 1 : i32
    %3 = arith.muli %arg0, %c1_i32 : i32
    %4 = arith.addi %3, %arg1 : i32
    %c4_i32 = arith.constant 4 : i32
    %5 = arith.muli %4, %c4_i32 : i32
    %6 = tpu.iota {dimensions = array<i32: 0>} : vector<4x1xi32>
    %7 = vector.broadcast %5 : i32 to vector<4x1xi32>
    %8 = arith.addi %7, %6 : vector<4x1xi32>
    %c4_i32_1 = arith.constant 4 : i32
    %9 = vector.broadcast %c4_i32_1 : i32 to vector<4x1xi32>
    %10 = arith.cmpi slt, %8, %9 : vector<4x1xi32>
    %c0 = arith.constant 0 : index
    %c0_2 = arith.constant 0 : index
    %11 = vector.load %arg2[%c0, %c0_2] : memref<4x128xf32, #tpu.memory_space<vmem>>, vector<4x128xf32>
    %cst = arith.constant 0.000000e+00 : f32
    %12 = vector.shape_cast %10 : vector<4x1xi1> to vector<4x1xi1>
    %13 = vector.broadcast %12 : vector<4x1xi1> to vector<4x128xi1>
    %14 = vector.broadcast %cst : f32 to vector<4x128xf32>
    %15 = arith.select %13, %11, %14 : vector<4x128xi1>, vector<4x128xf32>
    %c0_3 = arith.constant 0 : index
    %c0_4 = arith.constant 0 : index
    %16 = vector.load %arg3[%c0_3, %c0_4] : memref<4x128xf32, #tpu.memory_space<vmem>>, vector<4x128xf32>
    %cst_5 = arith.constant 0.000000e+00 : f32
    %17 = vector.shape_cast %10 : vector<4x1xi1> to vector<4x1xi1>
    %18 = vector.broadcast %17 : vector<4x1xi1> to vector<4x128xi1>
    %19 = vector.broadcast %cst_5 : f32 to vector<4x128xf32>
    %20 = arith.select %18, %16, %19 : vector<4x128xi1>, vector<4x128xf32>
    %cst_6 = arith.constant 1.000000e+00 : f32
    %21 = vector.broadcast %cst_6 : f32 to vector<4x128xf32>
    %22 = arith.subf %21, %15 : vector<4x128xf32>
    %23 = math.log %15 : vector<4x128xf32>
    %cst_7 = arith.constant -1.000000e+02 : f32
    %24 = vector.broadcast %cst_7 : f32 to vector<4x128xf32>
    %25 = arith.maximumf %23, %24 : vector<4x128xf32>
    %26 = math.log %22 : vector<4x128xf32>
    %cst_8 = arith.constant -1.000000e+02 : f32
    %27 = vector.broadcast %cst_8 : f32 to vector<4x128xf32>
    %28 = arith.maximumf %26, %27 : vector<4x128xf32>
    %29 = arith.subf %25, %28 : vector<4x128xf32>
    %30 = arith.mulf %20, %29 : vector<4x128xf32>
    %31 = arith.addf %28, %30 : vector<4x128xf32>
    %cst_9 = arith.constant 0.000000e+00 : f32
    %32 = vector.broadcast %cst_9 : f32 to vector<4x128xf32>
    %33 = arith.subf %32, %31 : vector<4x128xf32>
    %c0_10 = arith.constant 0 : index
    %c0_11 = arith.constant 0 : index
    %34 = vector.load %arg4[%c0_10, %c0_11] : memref<1x128xf32, #tpu.memory_space<vmem>>, vector<1x128xf32>
    %cst_12 = arith.constant dense<0.000000e+00> : vector<128xf32>
    %35 = vector.multi_reduction <add>, %33, %cst_12 [0] : vector<4x128xf32> to vector<128xf32>
    %36 = vector.shape_cast %35 : vector<128xf32> to vector<1x128xf32>
    %37 = arith.addf %34, %36 : vector<1x128xf32>
    %c0_13 = arith.constant 0 : index
    %c0_14 = arith.constant 0 : index
    %38 = vector.load %arg4[%c0_13, %c0_14] : memref<1x128xf32, #tpu.memory_space<vmem>>, vector<1x128xf32>
    tpu.vector_store %arg4[%c0_13, %c0_14], %37 {strides = array<i32>} : memref<1x128xf32, #tpu.memory_space<vmem>>, vector<1x128xf32>,
    return
  }
  func.func @transform_0(%arg0: i32, %arg1: i32) -> (i32, i32) {
    %c1_i32 = arith.constant 1 : i32
    %0 = arith.muli %arg0, %c1_i32 : i32
    %1 = arith.addi %0, %arg1 : i32
    %c0_i32 = arith.constant 0 : i32
    %2 = arith.minsi %1, %c0_i32 : i32
    %c0_i32_0 = arith.constant 0 : i32
    %c0_i32_1 = arith.constant 0 : i32
    return %2, %c0_i32_0 : i32, i32
  }
  func.func @transform_1(%arg0: i32, %arg1: i32) -> (i32, i32) {
    %c1_i32 = arith.constant 1 : i32
    %0 = arith.muli %arg0, %c1_i32 : i32
    %1 = arith.addi %0, %arg1 : i32
    %c0_i32 = arith.constant 0 : i32
    %2 = arith.minsi %1, %c0_i32 : i32
    %c0_i32_0 = arith.constant 0 : i32
    %c0_i32_1 = arith.constant 0 : i32
    return %2, %c0_i32_0 : i32, i32
  }
  func.func @transform_2(%arg0: i32, %arg1: i32) -> (i32, i32) {
    %c0_i32 = arith.constant 0 : i32
    %c0_i32_0 = arith.constant 0 : i32
    return %arg0, %c0_i32 : i32, i32
  }
}

</mosaic_0001>

<llo_original>
// kernel: tpu_custom_call.1
$region0: #{tpu_custom_call.1}
  #allocation0 [shape = 'u32[]', space=smem, size = 0x4, offset = 0x4, fixed_abs, tag = 'smem constant byte address 0x4 - core index']
  #allocation1 [shape = 'u32[144,128]{1,0:T(1,128)}', space=vmem, size = 0x12000, scoped, tag = 'internal scratch']
  %s0 = inlined_call_operand.hbm [shape: f32[4,128], index: 0, kind: input, shape index: {}]
  %s1 = inlined_call_operand.hbm [shape: f32[4,128], index: 1, kind: input, shape index: {}]
  %s2 = inlined_call_operand.hbm [shape: f32[1,128], index: 2, kind: output, shape index: {}]
  %s3 = sld [smem:[#allocation0]]
  $region30: #{tpu_custom_call.1} parent=0
    _
  %s5 = ssub.s32 1, %s3
  %s6 = scalar_select 0, %s5, %s3
  $region1: #{tpu_custom_call.1} parent=0
    #allocation2 [shape = 'u8[2048]{0}', space=vmem, size = 0x800, scoped, tag = 'input window, operand 0, single buffered']
    #allocation3 [shape = 's32[1]{0}', space=sflag, size = 0x4, scoped, tag = 'scoped memory for tpu_custom_call.1']
    #allocation4 [shape = 's32[1]{0}', space=sflag, size = 0x4, scoped, tag = 'scoped memory for tpu_custom_call.1']
    #allocation5 [shape = 'u8[2048]{0}', space=vmem, size = 0x800, scoped, tag = 'input window, operand 1, single buffered']
    #allocation6 [shape = 's32[1]{0}', space=sflag, size = 0x4, scoped, tag = 'scoped memory for tpu_custom_call.1']
    #allocation7 [shape = 'u8[512]{0}', space=vmem, size = 0x400, scoped, tag = 'output window, operand 0, single buffered']
    %7 = vsyncpa [#allocation3], 0
    %8 = vsyncpa [#allocation6], 0
    %9 = vsyncpa [#allocation4], 0
    // Predicated region
    $region2: #{tpu_custom_call.1} parent=1 // pred_check
      _
    $region3: #{tpu_custom_call.1} parent=1 // pred_check_branch
      %11 = sbr.rel (0) target = $region5
    $region4: #{tpu_custom_call.1} parent=1 // pred_region
      %s12 = sadd.s32 0, 0
      %p13 = scmp.lt.s32.totalorder %s12, 0
      %s14 = scalar_select %p13, %s12, 0
      %s16 = ssub.s32 64, 64
      %17 = vsyncadd [#allocation3], %s16
      %s18 = smul.addr %s14, 64
      %s19 = scalar_lea.hbm %s0, %s18
      %s21 = sshll.u32 [#allocation2], 4
      %s22 = int_to_ptr.vmem [resolvable:$true] %s21
      %24 = dma.hbm_to_vmem [thread:$0]  %s19, 64, %s22, [#allocation3]
    $region5: #{tpu_custom_call.1} parent=1 // pred_fallthru
      _
    // Predicated region
    $region6: #{tpu_custom_call.1} parent=1 // pred_check
      _
    $region7: #{tpu_custom_call.1} parent=1 // pred_check_branch
      %26 = sbr.rel (0) target = $region9
    $region8: #{tpu_custom_call.1} parent=1 // pred_region
      %s27 = sadd.s32 0, 0
      %p28 = scmp.lt.s32.totalorder %s27, 0
      %s29 = scalar_select %p28, %s27, 0
      %s31 = ssub.s32 64, 64
      %32 = vsyncadd [#allocation6], %s31
      %s33 = smul.addr %s29, 64
      %s34 = scalar_lea.hbm %s1, %s33
      %s36 = sshll.u32 [#allocation5], 4
      %s37 = int_to_ptr.vmem [resolvable:$true] %s36
      %39 = dma.hbm_to_vmem [thread:$0]  %s34, 64, %s37, [#allocation6]
    $region9: #{tpu_custom_call.1} parent=1 // pred_fallthru
      _
    // Predicated region
    $region10: #{tpu_custom_call.1} parent=1 // pred_check
      _
    $region11: #{tpu_custom_call.1} parent=1 // pred_check_branch
      %41 = sbr.rel (0) target = $region13
    $region12: #{tpu_custom_call.1} parent=1 // pred_region
      %42 = dma.done [#allocation3], 64
    $region13: #{tpu_custom_call.1} parent=1 // pred_fallthru
      _
    // Predicated region
    $region14: #{tpu_custom_call.1} parent=1 // pred_check
      _
    $region15: #{tpu_custom_call.1} parent=1 // pred_check_branch
      %44 = sbr.rel (0) target = $region17
    $region16: #{tpu_custom_call.1} parent=1 // pred_region
      %45 = dma.done [#allocation6], 64
    $region17: #{tpu_custom_call.1} parent=1 // pred_fallthru
      _
    %s46 = sadd.s32 0, 0
    %p47 = scmp.lt.s32.totalorder %s46, 0
    %s48 = scalar_select %p47, %s46, 0
    %s49 = sadd.s32 0, 0
    %p50 = scmp.lt.s32.totalorder %s49, 0
    %s51 = scalar_select %p50, %s49, 0
    %p52 = scmp.eq.s32.totalorder 0, 0
    // Predicated region
    $region18: #{tpu_custom_call.1} parent=1 // pred_check
      %p53 = pneg %p52
    $region19: #{tpu_custom_call.1} parent=1 // pred_check_branch
      %55 = sbr.rel (%p53) target = $region21
    $region20: #{tpu_custom_call.1} parent=1 // pred_region
      %56 = vst [vmem:[#allocation7] sm:$0x1] 0.0
    $region21: #{tpu_custom_call.1} parent=1 // pred_fallthru
      _
    %s57 = sadd.s32 0, 0
    %s58 = smul.u32 %s57, 4
    %v59 = vlaneseq
    %v60 = vshrl.u32 %v59, 7
    %v61 = vstv %s58
    %v62 = vadd.s32 %v61, %v60
    %vm63 = vcmp.lt.s32.totalorder %v62, 4
    %v64 = vld [vmem:[#allocation2] sm:$0xf]
    %v65 = vsel %vm63, 1, 0
    %vm66 = vcmp.eq.s32.totalorder %v65, 1
    %v67 = vsel %vm66, %v64, 0.0
    %v68 = vld [vmem:[#allocation5] sm:$0xf]
    %v69 = vsel %vm66, %v68, 0.0
    %v70 = vsub.f32 1.0, %v67
    %v71 = vlog2.pop %v67
    %v72 = vmul.f32 %v71, 0.6931472
    %v73 = vmax.f32 %v72, -100.0
    %v74 = vlog2.pop %v70
    %v75 = vmul.f32 %v74, 0.6931472
    %v76 = vmax.f32 %v75, -100.0
    %v77 = vsub.f32 %v73, %v76
    %v78 = vmul.f32 %v69, %v77
    %v79 = vadd.f32 %v76, %v78
    %v80 = vsub.f32 0.0, %v79
    %v81 = vld [vmem:[#allocation7] sm:$0x1]
    %vm82 = vcmask 1043456
    %v83 = vsel %vm82, %v80, 0.0
    %v84 = vrot.slane %v83, 4
    %v85 = vadd.f32 %v83, %v84
    %v86 = vrot.slane %v85, 2
    %v87 = vadd.f32 %v85, %v86
    %v88 = vrot.slane %v87, 1
    %v89 = vadd.f32 %v87, %v88
    %v90 = vadd.f32 %v81, %v89
    %91 = vst [vmem:[#allocation7] sm:$0x1] %v90
    // Predicated region
    $region22: #{tpu_custom_call.1} parent=1 // pred_check
      _
    $region23: #{tpu_custom_call.1} parent=1 // pred_check_branch
      %93 = sbr.rel (0) target = $region25
    $region24: #{tpu_custom_call.1} parent=1 // pred_region
      %s95 = ssub.s32 16, 16
      %96 = vsyncadd [#allocation4], %s95
      %s98 = sshll.u32 [#allocation7], 4
      %s99 = int_to_ptr.vmem [resolvable:$true] %s98
      %101 = dma.vmem_to_hbm [thread:$0]  %s99, 16, %s2, [#allocation4]
    $region25: #{tpu_custom_call.1} parent=1 // pred_fallthru
      _
    // Predicated region
    $region26: #{tpu_custom_call.1} parent=1 // pred_check
      _
    $region27: #{tpu_custom_call.1} parent=1 // pred_check_branch
      %103 = sbr.rel (0) target = $region29
    $region28: #{tpu_custom_call.1} parent=1 // pred_region
      %104 = dma.done [#allocation4], 16
    $region29: #{tpu_custom_call.1} parent=1 // pred_fallthru
      _
    %105 = vsyncpa [#allocation3], 1
    %106 = vsyncpa [#allocation6], 1
    %107 = vsyncpa [#allocation4], 1

</llo_original>
